<compile_context>
chip_gen: v7x
topology: tpu7x:2x2x1
jax: 0.10.0
libtpu: 0.0.40
codegen_flags: <defaults>
</compile_context>

<pallas_src>
import jax
import jax.numpy as jnp
from jax.experimental import pallas as pl
from jax.experimental.pallas import tpu as pltpu

_SUBLANE = 8


def _qnet_kernel(x_ref, w1_ref, b1_ref, w2_ref, b2_ref, o_ref):
    # x: [TB, IN]   w1: [IN, H]  b1: [1, H]   w2: [H, O]  b2: [1, O]   o: [TB, O]
    x = x_ref[...]
    h = jnp.dot(x.astype(w1_ref.dtype), w1_ref[...],
                preferred_element_type=jnp.float32) + b1_ref[...]
    h = jnp.maximum(h, 0.0)  # ReLU on the f32 VPU path (safe on v5e too)
    out = jnp.dot(h.astype(w2_ref.dtype), w2_ref[...],
                  preferred_element_type=jnp.float32) + b2_ref[...]
    o_ref[...] = out.astype(o_ref.dtype)


def _round_up(n, m):
    return pl.cdiv(n, m) * m


def prepare_params(w1, b1, w2, b2, *, mxu_dtype=jnp.bfloat16):
    """One-time parameter prep (call once at init, reuse every forward).

    Weights -> mxu_dtype (bf16 MXU operands), biases -> f32 [1, N] rows.
    """
    return (
        w1.astype(mxu_dtype),
        b1.astype(jnp.float32).reshape(1, -1),
        w2.astype(mxu_dtype),
        b2.astype(jnp.float32).reshape(1, -1),
    )


def linear_qnet_forward(x, params, *, block_b=2048):
    """Forward pass of Linear_QNet.

    x:      [B, input_size]
    params: output of prepare_params -> (w1 [in,H], b1 [1,H], w2 [H,O], b2 [1,O])
    Returns [B, output_size] in float32.
    """
    w1, b1, w2, b2 = params
    B, in_size = x.shape
    hidden = w1.shape[1]
    out_size = w2.shape[1]

    # --- batch tiling --------------------------------------------------------
    bp = _round_up(B, _SUBLANE)
    # Number of grid steps: cap the tile at block_b; prefer >=2 (even) steps
    # once there is enough work so v7x's two TensorCores both get grid steps.
    n_steps = pl.cdiv(bp, block_b)
    if bp >= 2 * _SUBLANE:
        n_steps = max(n_steps, 2)
    if n_steps > 1 and n_steps % 2:
        n_steps += 1
    tb = _round_up(pl.cdiv(bp, n_steps), _SUBLANE)
    bp = _round_up(bp, tb)
    n_steps = bp // tb

    # Only pad the batch when actually needed (shape is static at trace time).
    xp = x if bp == B else jnp.pad(x, ((0, bp - B), (0, 0)))

    # True (unpadded) work estimate — advisory scheduling hint only.
    flops = 2 * B * in_size * hidden + 2 * B * hidden * out_size
    bytes_accessed = (
        B * in_size * x.dtype.itemsize
        + in_size * hidden * w1.dtype.itemsize
        + hidden * b1.dtype.itemsize
        + hidden * out_size * w2.dtype.itemsize
        + out_size * b2.dtype.itemsize
        + B * out_size * 4
    )

    out_p = pl.pallas_call(
        _qnet_kernel,
        out_shape=jax.ShapeDtypeStruct((bp, out_size), jnp.float32),
        grid=(n_steps,),
        in_specs=[
            # x streams per batch tile.
            pl.BlockSpec((tb, in_size), lambda i: (i, 0)),
            # Weights / biases: same (full-extent) block every step -> VMEM-resident.
            pl.BlockSpec((in_size, hidden), lambda i: (0, 0)),
            pl.BlockSpec((1, hidden), lambda i: (0, 0)),
            pl.BlockSpec((hidden, out_size), lambda i: (0, 0)),
            pl.BlockSpec((1, out_size), lambda i: (0, 0)),
        ],
        out_specs=pl.BlockSpec((tb, out_size), lambda i: (i, 0)),
        compiler_params=pltpu.CompilerParams(
            dimension_semantics=("parallel",),
        ),
        cost_estimate=pl.CostEstimate(
            flops=flops, transcendentals=0, bytes_accessed=bytes_accessed
        ),
    )(xp, w1, b1, w2, b2)

    return out_p if bp == B else out_p[:B]


def init_params(key, input_size, hidden_size, output_size):
    """Deterministic init mimicking nn.Linear defaults (uniform +/- 1/sqrt(fan_in))."""
    k1, k2, k3, k4 = jax.random.split(key, 4)
    lim1 = 1.0 / jnp.sqrt(input_size)
    lim2 = 1.0 / jnp.sqrt(hidden_size)
    # Stored as [in, out] (transposed vs. PyTorch's [out, in]) for row-major matmul.
    w1 = jax.random.uniform(k1, (input_size, hidden_size), jnp.float32, -lim1, lim1)
    b1 = jax.random.uniform(k2, (hidden_size,), jnp.float32, -lim1, lim1)
    w2 = jax.random.uniform(k3, (hidden_size, output_size), jnp.float32, -lim2, lim2)
    b2 = jax.random.uniform(k4, (output_size,), jnp.float32, -lim2, lim2)
    return w1, b1, w2, b2


def _ref_forward(x, w1, b1, w2, b2, mxu_dtype=jnp.bfloat16):
    """Pure-JAX reference matching the kernel's bf16-operand / f32-accum math."""
    h = jnp.dot(x.astype(mxu_dtype), w1.astype(mxu_dtype),
                preferred_element_type=jnp.float32) + b1
    h = jnp.maximum(h, 0.0)
    return jnp.dot(h.astype(mxu_dtype), w2.astype(mxu_dtype),
                   preferred_element_type=jnp.float32) + b2


if __name__ == "__main__":
    # Small shapes consistent with a Q-network: state vec -> hidden -> actions.
    batch, input_size, hidden_size, output_size = 2, 12, 32, 3

    key = jax.random.PRNGKey(0)
    kx, kp = jax.random.split(key)
    x = jax.random.normal(kx, (batch, input_size), jnp.float32)
    w1, b1, w2, b2 = init_params(kp, input_size, hidden_size, output_size)
    params = prepare_params(w1, b1, w2, b2)  # one-time prep, reused below

    out = jax.block_until_ready(linear_qnet_forward(x, params))
    assert out.shape == (batch, output_size)

    # Tight check against a bf16-operand / f32-accum reference...
    ref = _ref_forward(x, w1, b1, w2, b2)
    assert jnp.allclose(out, ref, atol=1e-3, rtol=1e-3), (out, ref)
    # ...and a coarse check against the full-f32 math of the PyTorch module.
    ref_f32 = jnp.maximum(x @ w1 + b1, 0.0) @ w2 + b2
    assert jnp.allclose(out, ref_f32, atol=3e-2, rtol=3e-2), (out, ref_f32)

    # Larger batch -> exercises the multi-step (2 TensorCore-friendly) grid.
    big_b = 1024
    xb = jax.random.normal(kx, (big_b, input_size), jnp.float32)
    outb = jax.block_until_ready(linear_qnet_forward(xb, params))
    refb = _ref_forward(xb, w1, b1, w2, b2)
    assert outb.shape == (big_b, output_size)
    assert jnp.allclose(outb, refb, atol=1e-3, rtol=1e-3)

    # Non-multiple batch -> exercises the (conditional) pad + slice path.
    odd_b = 1030
    xo = jax.random.normal(kx, (odd_b, input_size), jnp.float32)
    outo = jax.block_until_ready(linear_qnet_forward(xo, params))
    refo = _ref_forward(xo, w1, b1, w2, b2)
    assert outo.shape == (odd_b, output_size)
    assert jnp.allclose(outo, refo, atol=1e-3, rtol=1e-3)

    print("KERNEL_OK")
</pallas_src>

<mosaic_0001>
module attributes {stable_mosaic.version = 11 : i64} {
  func.func @_qnet_kernel(%arg0: i32, %arg1: memref<8x12xf32, #tpu.memory_space<vmem>>, %arg2: memref<12x32xbf16, #tpu.memory_space<vmem>>, %arg3: memref<1x32xf32, #tpu.memory_space<vmem>>, %arg4: memref<32x3xbf16, #tpu.memory_space<vmem>>, %arg5: memref<1x3xf32, #tpu.memory_space<vmem>>, %arg6: memref<8x3xf32, #tpu.memory_space<vmem>>) attributes {dimension_semantics = [#tpu.dimension_semantics<parallel>], iteration_bounds = array<i64: 1>, scalar_prefetch = 0 : i64, scratch_operands = 0 : i64, tpu.core_type = #tpu.core_type<tc>, window_params = [{transform_indices = @transform_0, window_bounds = array<i64: 8, 12>}, {pipeline_mode = #tpu.pipeline_mode<synchronous>, transform_indices = @transform_1, window_bounds = array<i64: 12, 32>}, {pipeline_mode = #tpu.pipeline_mode<synchronous>, transform_indices = @transform_2, window_bounds = array<i64: 1, 32>}, {pipeline_mode = #tpu.pipeline_mode<synchronous>, transform_indices = @transform_3, window_bounds = array<i64: 32, 3>}, {pipeline_mode = #tpu.pipeline_mode<synchronous>, transform_indices = @transform_4, window_bounds = array<i64: 1, 3>}, {transform_indices = @transform_5, window_bounds = array<i64: 8, 3>}]} {
    %c0 = arith.constant 0 : index
    %c0_0 = arith.constant 0 : index
    %0 = vector.load %arg1[%c0, %c0_0] : memref<8x12xf32, #tpu.memory_space<vmem>>, vector<8x12xf32>
    %1 = arith.truncf %0 : vector<8x12xf32> to vector<8x12xbf16>
    %c0_1 = arith.constant 0 : index
    %c0_2 = arith.constant 0 : index
    %2 = vector.load %arg2[%c0_1, %c0_2] : memref<12x32xbf16, #tpu.memory_space<vmem>>, vector<12x32xbf16>
    %cst = arith.constant dense<0.000000e+00> : vector<8x32xf32>
    %3 = tpu.matmul %1, %2, %cst {dimension_numbers = #tpu.dot_dimension_numbers<[1], [0], [0], [1], [0, 0, 1, 1], [], []>} : vector<8x12xbf16>, vector<12x32xbf16>, vector<8x32xf32> -> vector<8x32xf32>
    %c0_3 = arith.constant 0 : index
    %c0_4 = arith.constant 0 : index
    %4 = vector.load %arg3[%c0_3, %c0_4] : memref<1x32xf32, #tpu.memory_space<vmem>>, vector<1x32xf32>
    %5 = vector.broadcast %4 : vector<1x32xf32> to vector<8x32xf32>
    %6 = arith.addf %3, %5 : vector<8x32xf32>
    %cst_5 = arith.constant 0.000000e+00 : f32
    %7 = vector.broadcast %cst_5 : f32 to vector<8x32xf32>
    %8 = arith.maximumf %6, %7 : vector<8x32xf32>
    %9 = arith.truncf %8 : vector<8x32xf32> to vector<8x32xbf16>
    %c0_6 = arith.constant 0 : index
    %c0_7 = arith.constant 0 : index
    %10 = vector.load %arg4[%c0_6, %c0_7] : memref<32x3xbf16, #tpu.memory_space<vmem>>, vector<32x3xbf16>
    %cst_8 = arith.constant dense<0.000000e+00> : vector<8x3xf32>
    %11 = tpu.matmul %9, %10, %cst_8 {dimension_numbers = #tpu.dot_dimension_numbers<[1], [0], [0], [1], [0, 0, 1, 1], [], []>} : vector<8x32xbf16>, vector<32x3xbf16>, vector<8x3xf32> -> vector<8x3xf32>
    %c0_9 = arith.constant 0 : index
    %c0_10 = arith.constant 0 : index
    %12 = vector.load %arg5[%c0_9, %c0_10] : memref<1x3xf32, #tpu.memory_space<vmem>>, vector<1x3xf32>
    %13 = vector.broadcast %12 : vector<1x3xf32> to vector<8x3xf32>
    %14 = arith.addf %11, %13 : vector<8x3xf32>
    %c0_11 = arith.constant 0 : index
    %c0_12 = arith.constant 0 : index
    %15 = vector.load %arg6[%c0_11, %c0_12] : memref<8x3xf32, #tpu.memory_space<vmem>>, vector<8x3xf32>
    tpu.vector_store %arg6[%c0_11, %c0_12], %14 {strides = array<i32>} : memref<8x3xf32, #tpu.memory_space<vmem>>, vector<8x3xf32>,
    return
  }
  func.func @transform_0(%arg0: i32) -> (i32, i32) {
    %c0_i32 = arith.constant 0 : i32
    %c0_i32_0 = arith.constant 0 : i32
    return %arg0, %c0_i32 : i32, i32
  }
  func.func @transform_1(%arg0: i32) -> (i32, i32) {
    %c0_i32 = arith.constant 0 : i32
    %c0_i32_0 = arith.constant 0 : i32
    %c0_i32_1 = arith.constant 0 : i32
    return %c0_i32, %c0_i32_0 : i32, i32
  }
  func.func @transform_2(%arg0: i32) -> (i32, i32) {
    %c0_i32 = arith.constant 0 : i32
    %c0_i32_0 = arith.constant 0 : i32
    %c0_i32_1 = arith.constant 0 : i32
    return %c0_i32, %c0_i32_0 : i32, i32
  }
  func.func @transform_3(%arg0: i32) -> (i32, i32) {
    %c0_i32 = arith.constant 0 : i32
    %c0_i32_0 = arith.constant 0 : i32
    %c0_i32_1 = arith.constant 0 : i32
    return %c0_i32, %c0_i32_0 : i32, i32
  }
  func.func @transform_4(%arg0: i32) -> (i32, i32) {
    %c0_i32 = arith.constant 0 : i32
    %c0_i32_0 = arith.constant 0 : i32
    %c0_i32_1 = arith.constant 0 : i32
    return %c0_i32, %c0_i32_0 : i32, i32
  }
  func.func @transform_5(%arg0: i32) -> (i32, i32) {
    %c0_i32 = arith.constant 0 : i32
    %c0_i32_0 = arith.constant 0 : i32
    return %arg0, %c0_i32 : i32, i32
  }
}

</mosaic_0001>

<llo_original>
// kernel: tpu_custom_call.1
$region0: #{tpu_custom_call.1}
  #allocation0 [shape = 'u32[]', space=smem, size = 0x4, offset = 0x4, fixed_abs, tag = 'smem constant byte address 0x4 - core index']
  #allocation1 [shape = 'u32[144,128]{1,0:T(1,128)}', space=vmem, size = 0x12000, scoped, tag = 'internal scratch']
  %s0 = inlined_call_operand.vmem [shape: f32[8,12], index: 0, kind: input, shape index: {}]
  %s1 = inlined_call_operand.vmem [shape: bf16[12,32], index: 1, kind: input, shape index: {}]
  %s2 = inlined_call_operand.vmem [shape: f32[1,32], index: 2, kind: input, shape index: {}]
  %s3 = inlined_call_operand.vmem [shape: bf16[32,3], index: 3, kind: input, shape index: {}]
  %s4 = inlined_call_operand.vmem [shape: f32[1,3], index: 4, kind: input, shape index: {}]
  %s5 = inlined_call_operand.vmem [shape: f32[8,3], index: 5, kind: output, shape index: {}]
  %s6 = sld [smem:[#allocation0]]
  $region30: #{tpu_custom_call.1} parent=0
    _
  %s8 = ssub.s32 1, %s6
  %s9 = scalar_select 0, %s8, %s6
  // Predicated region
  $region2: #{tpu_custom_call.1} parent=0 // pred_check
    _
  $region3: #{tpu_custom_call.1} parent=0 // pred_check_branch
    %11 = sbr.rel (0) target = $region5
  $region4: #{tpu_custom_call.1} parent=0 // pred_region
    _
  $region5: #{tpu_custom_call.1} parent=0 // pred_fallthru
    _
  // Predicated region
  $region6: #{tpu_custom_call.1} parent=0 // pred_check
    _
  $region7: #{tpu_custom_call.1} parent=0 // pred_check_branch
    %13 = sbr.rel (0) target = $region9
  $region8: #{tpu_custom_call.1} parent=0 // pred_region
    _
  $region9: #{tpu_custom_call.1} parent=0 // pred_fallthru
    _
  // Predicated region
  $region10: #{tpu_custom_call.1} parent=0 // pred_check
    _
  $region11: #{tpu_custom_call.1} parent=0 // pred_check_branch
    %15 = sbr.rel (0) target = $region13
  $region12: #{tpu_custom_call.1} parent=0 // pred_region
    _
  $region13: #{tpu_custom_call.1} parent=0 // pred_fallthru
    _
  // Predicated region
  $region14: #{tpu_custom_call.1} parent=0 // pred_check
    _
  $region15: #{tpu_custom_call.1} parent=0 // pred_check_branch
    %17 = sbr.rel (0) target = $region17
  $region16: #{tpu_custom_call.1} parent=0 // pred_region
    _
  $region17: #{tpu_custom_call.1} parent=0 // pred_fallthru
    _
  // Predicated region
  $region18: #{tpu_custom_call.1} parent=0 // pred_check
    _
  $region19: #{tpu_custom_call.1} parent=0 // pred_check_branch
    %19 = sbr.rel (0) target = $region21
  $region20: #{tpu_custom_call.1} parent=0 // pred_region
    _
  $region21: #{tpu_custom_call.1} parent=0 // pred_fallthru
    _
  %v21 = vld [vmem:[%s0] sm:$0xff]
  %v22 = vpack.c.bf16 %v21, %v21
  %v23 = vld [vmem:[%s1] sm:$0xf]
  %v24 = vld [vmem:[%s1 + $0x4] sm:$0x3]
  %v25 = vld [vmem:[%s2] sm:$0x1]
  %v27 = vlaneseq
  %v28 = vshrl.u32 %v27, 7
  %v29 = vsub.s32 0, %v28
  %v30 = vrot.slane %v25, %v29
  %v34 = vunpack.c.l.b16 %v23
  %v35 = vunpack.c.l.b16 %v24
  %v36 = vpack.c.b16 %v35, %v34
  %vm37 = vcmask 97280
  %v39 = vsel %vm37, %v22, 0
  %vm41 = vcmask 1045504
  %v43 = vsel %vm41, %v36, 0
  %45 = vmatprep.subr.bf16.mxu0 0
  %46 = vmatpush1.bf16.msra.mxu0 %v43
  %47 = vmatprep.subr.bf16.mxu0 0
  %48 = vmatpush1.bf16.msra.mxu0 0
  %49 = vmatprep.subr.bf16.mxu0 0
  %50 = vmatpush1.bf16.msra.mxu0 0
  %51 = vmatprep.subr.bf16.mxu0 0
  %52 = vmatpush1.bf16.msra.mxu0 0
  %53 = vmatprep.subr.bf16.mxu0 0
  %54 = vmatpush1.bf16.msra.mxu0 0
  %55 = vmatprep.subr.bf16.mxu0 0
  %56 = vmatpush1.bf16.msra.mxu0 0
  %57 = vmatprep.subr.bf16.mxu0 0
  %58 = vmatpush1.bf16.msra.mxu0 0
  %59 = vmatprep.subr.bf16.mxu0 0
  %60 = vmatpush1.bf16.msra.mxu0 0
  %61 = vmatprep.subr.bf16.mxu0 0
  %62 = vmatpush1.bf16.msra.mxu0 0
  %63 = vmatprep.subr.bf16.mxu0 0
  %64 = vmatpush1.bf16.msra.mxu0 0
  %65 = vmatprep.subr.bf16.mxu0 0
  %66 = vmatpush1.bf16.msra.mxu0 0
  %67 = vmatprep.subr.bf16.mxu0 0
  %68 = vmatpush1.bf16.msra.mxu0 0
  %69 = vmatprep.subr.bf16.mxu0 0
  %70 = vmatpush1.bf16.msra.mxu0 0
  %71 = vmatprep.subr.bf16.mxu0 0
  %72 = vmatpush1.bf16.msra.mxu0 0
  %73 = vmatprep.subr.bf16.mxu0 0
  %74 = vmatpush1.bf16.msra.mxu0 0
  %75 = vmatprep.subr.bf16.mxu0 0
  %76 = vmatpush1.bf16.msra.mxu0 0
  %77 = vmatprep.mubr.bf16.mxu0 0
  %78 = vmatmul.mubr.bf16.gmra.mrb[0].mxu0 %v39
  %v79 = vpop.f32.mrb[0].mxu0
  %v80 = vadd.f32 %v30, %v79
  %v81 = vpop.f32.mrb[0].mxu0
  %v82 = vpop.f32.mrb[0].mxu0
  %v83 = vpop.f32.mrb[0].mxu0
  %84 = vdwg.mxu0
  %v85 = vmax.f32 %v80, 0.0
  %v86 = vpack.c.bf16 %v85, %v85
  %v87 = vld [vmem:[%s3] sm:$0xf]
  %v88 = vld [vmem:[%s3 + $0x4] sm:$0xf]
  %v89 = vld [vmem:[%s3 + $0x8] sm:$0xf]
  %v90 = vld [vmem:[%s3 + $0xc] sm:$0xf]
  %v91 = vld [vmem:[%s4] sm:$0x1]
  %v93 = vlaneseq
  %v94 = vshrl.u32 %v93, 7
  %v95 = vsub.s32 0, %v94
  %v96 = vrot.slane %v91, %v95
  %v102 = vunpack.c.l.b16 %v87
  %v103 = vunpack.c.l.b16 %v88
  %v104 = vunpack.c.l.b16 %v89
  %v105 = vunpack.c.l.b16 %v90
  %v106 = vpack.c.b16 %v103, %v102
  %v107 = vpack.c.b16 %v105, %v104
  %vm110 = vcmask 261120
  %v112 = vsel %vm110, %v86, 0
  %114 = vmatprep.subr.bf16.mxu0 0
  %115 = vmatpush1.bf16.msra.mxu0 %v106
  %116 = vmatprep.subr.bf16.mxu0 0
  %117 = vmatpush1.bf16.msra.mxu0 %v107
  %118 = vmatprep.subr.bf16.mxu0 0
  %119 = vmatpush1.bf16.msra.mxu0 0
  %120 = vmatprep.subr.bf16.mxu0 0
  %121 = vmatpush1.bf16.msra.mxu0 0
  %122 = vmatprep.subr.bf16.mxu0 0
  %123 = vmatpush1.bf16.msra.mxu0 0
  %124 = vmatprep.subr.bf16.mxu0 0
  %125 = vmatpush1.bf16.msra.mxu0 0
  %126 = vmatprep.subr.bf16.mxu0 0
  %127 = vmatpush1.bf16.msra.mxu0 0
  %128 = vmatprep.subr.bf16.mxu0 0
  %129 = vmatpush1.bf16.msra.mxu0 0
  %130 = vmatprep.subr.bf16.mxu0 0
  %131 = vmatpush1.bf16.msra.mxu0 0
  %132 = vmatprep.subr.bf16.mxu0 0
  %133 = vmatpush1.bf16.msra.mxu0 0
  %134 = vmatprep.subr.bf16.mxu0 0
  %135 = vmatpush1.bf16.msra.mxu0 0
  %136 = vmatprep.subr.bf16.mxu0 0
  %137 = vmatpush1.bf16.msra.mxu0 0
  %138 = vmatprep.subr.bf16.mxu0 0
  %139 = vmatpush1.bf16.msra.mxu0 0
  %140 = vmatprep.subr.bf16.mxu0 0
  %141 = vmatpush1.bf16.msra.mxu0 0
  %142 = vmatprep.subr.bf16.mxu0 0
  %143 = vmatpush1.bf16.msra.mxu0 0
  %144 = vmatprep.subr.bf16.mxu0 0
  %145 = vmatpush1.bf16.msra.mxu0 0
  %146 = vmatprep.mubr.bf16.mxu0 0
  %147 = vmatmul.mubr.bf16.gmra.mrb[0].mxu0 %v112
  %v148 = vpop.f32.mrb[0].mxu0
  %v149 = vadd.f32 %v96, %v148
  %v150 = vpop.f32.mrb[0].mxu0
  %v151 = vpop.f32.mrb[0].mxu0
  %v152 = vpop.f32.mrb[0].mxu0
  %153 = vdwg.mxu0
  %vm154 = vcmask 23552
  %155 = vst.msk [vmem:[%s5] sm:$0xff] %vm154, %v149
  // Predicated region
  $region22: #{tpu_custom_call.1} parent=0 // pred_check
    _
  $region23: #{tpu_custom_call.1} parent=0 // pred_check_branch
    %157 = sbr.rel (0) target = $region25
  $region24: #{tpu_custom_call.1} parent=0 // pred_region
    _
  $region25: #{tpu_custom_call.1} parent=0 // pred_fallthru
    _
  // Predicated region
  $region26: #{tpu_custom_call.1} parent=0 // pred_check
    _
  $region27: #{tpu_custom_call.1} parent=0 // pred_check_branch
    %159 = sbr.rel (0) target = $region29
  $region28: #{tpu_custom_call.1} parent=0 // pred_region
    _
  $region29: #{tpu_custom_call.1} parent=0 // pred_fallthru
    _

</llo_original>
